<compile_context>
chip_gen: v6e
topology: v6e:2x2x1
jax: 0.10.0
libtpu: 0.0.40
codegen_flags: <defaults>
</compile_context>

<pallas_src>
import functools

import jax
import jax.numpy as jnp
from jax import lax
from jax.experimental import pallas as pl
from jax.experimental.pallas import tpu as pltpu


# ---- "cfg" (synthetic, small) -------------------------------------------------
IN_CHANNEL = 32     # cfg.in_channel
HIDDEN     = 32     # cfg.hidden_size
OUT        = 16     # cfg.out_channel
DROP       = 0.0    # cfg.drop  (inactive: single-layer LSTM -> dropout unused)
BATCH      = 8
SEQ        = 8


# ---- Pallas kernel ------------------------------------------------------------
def _audio2kp_kernel(x_ref, w_ih_ref, w_hh_ref, b_ref, fc_w_ref, fc_b_ref, out_ref):
    """x_ref: (T, B, C_in) f32 VMEM.  Weights pre-permuted to gate order (i, f, o, g)
    and pre-cast to bf16 (biases stay f32)."""
    T, B, C = x_ref.shape
    H = w_hh_ref.shape[0]

    # One-shot input projection + bias for every time step (off the serial chain).
    # (T, B, C) -> (T*B, C) is a zero-cost leading-dim collapse (B == 8 sublanes).
    # bf16 operands, f32 accumulation: one MXU pass.
    x_flat = x_ref[...].reshape(T * B, C).astype(jnp.bfloat16)
    gates_x = (jnp.dot(x_flat, w_ih_ref[...], preferred_element_type=jnp.float32)
               + b_ref[...]).reshape(T, B, 4 * H)          # (T, B, 4H) f32

    w_hh = w_hh_ref[...]                                   # (H, 4H) bf16, vreg-resident

    h = jnp.zeros((B, H), jnp.float32)
    c = jnp.zeros((B, H), jnp.float32)

    # Fully unrolled recurrence (T=8): only h @ W_hh + nonlinearities on the critical
    # path.  For much longer SEQ, switch to lax.fori_loop(..., unroll=small) and stage
    # gates_x per step instead of keeping (T, B, 4H) live.
    for t in range(T):
        gates = gates_x[t] + jnp.dot(h.astype(jnp.bfloat16), w_hh,
                                     preferred_element_type=jnp.float32)
        # The 32-lane gate extractions below cost a few XLU ops per step; they are
        # free filler under the MXU/EUP latency at this size (leave unless XLU binds).
        sig = jax.nn.sigmoid(gates[:, :3 * H])             # i, f, o in one EUP launch
        i_g = sig[:, 0 * H:1 * H]
        f_g = sig[:, 1 * H:2 * H]
        o_g = sig[:, 2 * H:3 * H]
        g_g = jnp.tanh(gates[:, 3 * H:])                   # cell candidate
        c = f_g * c + i_g * g_g                            # f32 elementwise (v5e-safe)
        h = o_g * jnp.tanh(c)

    # Output head.  (B, OUT) = (8, 16) lowers to masked partial stores; negligible at
    # this size — pad/stack OUT toward a multiple of 128 lanes only if it ever grows.
    out_ref[...] = (jnp.dot(h.astype(jnp.bfloat16), fc_w_ref[...],
                            preferred_element_type=jnp.float32)
                    + fc_b_ref[...])


# ---- one-time parameter preparation (hoisted out of the per-call path) --------
def prepare_params(params):
    """Permute gate columns (i, f, g, o) -> (i, f, o, g) so the kernel applies one
    sigmoid over 3H lanes + one tanh over H lanes, and cast matmul weights to bf16.
    Call ONCE at parameter-prep time."""
    w_ih, w_hh, b, fc_w, fc_b = params
    H = w_hh.shape[0]

    def permute(w):
        return jnp.concatenate(
            [w[..., :2 * H], w[..., 3 * H:4 * H], w[..., 2 * H:3 * H]], axis=-1)

    return (permute(w_ih).astype(jnp.bfloat16),
            permute(w_hh).astype(jnp.bfloat16),
            permute(b).astype(jnp.float32),        # bias added post-matmul in f32
            fc_w.astype(jnp.bfloat16),
            fc_b.astype(jnp.float32))


def audio2kp_forward(x, prepared_params, *, time_major=False):
    """Forward pass.  x: (T, B, C) if time_major else (B, T, C).  Returns (B, OUT) f32.
    `prepared_params` must come from `prepare_params` (permuted, bf16 weights)."""
    w_ih, w_hh, b, fc_w, fc_b = prepared_params
    x_tm = x if time_major else jnp.transpose(x, (1, 0, 2))   # single fused op if needed
    T, B, C = x_tm.shape
    O = fc_w.shape[1]

    # Whole-array VMEM residency (~70 KB total): no grid / tiling / pipelining needed
    # on v5e (128 MiB), v6e (128 MiB) or v7x (64 MiB per TC).
    vmem = pl.BlockSpec(memory_space=pltpu.MemorySpace.VMEM)
    return pl.pallas_call(
        _audio2kp_kernel,
        out_shape=jax.ShapeDtypeStruct((B, O), jnp.float32),
        in_specs=[vmem] * 6,
        out_specs=vmem,
    )(x_tm, w_ih, w_hh, b, fc_w, fc_b)


# ---- deterministic parameter init (PyTorch-style U(-1/sqrt(H), 1/sqrt(H))) ----
def init_params(key):
    k = 1.0 / jnp.sqrt(HIDDEN)
    ks = jax.random.split(key, 6)
    w_ih = jax.random.uniform(ks[0], (IN_CHANNEL, 4 * HIDDEN), jnp.float32, -k, k)
    w_hh = jax.random.uniform(ks[1], (HIDDEN, 4 * HIDDEN), jnp.float32, -k, k)
    b_ih = jax.random.uniform(ks[2], (1, 4 * HIDDEN), jnp.float32, -k, k)
    b_hh = jax.random.uniform(ks[3], (1, 4 * HIDDEN), jnp.float32, -k, k)
    b = b_ih + b_hh
    fc_w = jax.random.uniform(ks[4], (HIDDEN, OUT), jnp.float32, -k, k)
    fc_b = jax.random.uniform(ks[5], (1, OUT), jnp.float32, -k, k)
    return (w_ih, w_hh, b, fc_w, fc_b)


# ---- pure-JAX reference (torch.nn.LSTM + nn.Linear formula, gate order i,f,g,o) ----
# Uses the same deliberate bf16-operand / f32-accumulate matmul policy as the kernel,
# on the ORIGINAL (unpermuted, f32) parameters, so it independently checks the gate
# permutation, bias fold and time indexing.
def reference_forward(x, params, matmul_dtype=jnp.bfloat16):
    w_ih, w_hh, b, fc_w, fc_b = params
    B = x.shape[0]
    H = w_hh.shape[0]

    def md(a, w):
        return jnp.dot(a.astype(matmul_dtype), w.astype(matmul_dtype),
                       preferred_element_type=jnp.float32)

    def step(carry, x_t):
        h, c = carry
        gates = md(x_t, w_ih) + md(h, w_hh) + b
        i_g = jax.nn.sigmoid(gates[:, 0 * H:1 * H])
        f_g = jax.nn.sigmoid(gates[:, 1 * H:2 * H])
        g_g = jnp.tanh(gates[:, 2 * H:3 * H])
        o_g = jax.nn.sigmoid(gates[:, 3 * H:4 * H])
        c = f_g * c + i_g * g_g
        h = o_g * jnp.tanh(c)
        return (h, c), None

    h0 = jnp.zeros((B, H), jnp.float32)
    c0 = jnp.zeros((B, H), jnp.float32)
    (h_T, _), _ = lax.scan(step, (h0, c0), jnp.transpose(x, (1, 0, 2)))
    return md(h_T, fc_w) + fc_b


if __name__ == "__main__":
    key = jax.random.PRNGKey(0)
    k_x, k_p = jax.random.split(key)
    x = jax.random.normal(k_x, (BATCH, SEQ, IN_CHANNEL), jnp.float32)   # (B, T, C)
    params = init_params(k_p)

    # One-time prep (outside the per-call path): gate permute + bf16 cast, time-major x.
    prepared = prepare_params(params)
    x_tm = jnp.transpose(x, (1, 0, 2))                                   # (T, B, C)

    fwd = jax.jit(functools.partial(audio2kp_forward, time_major=True))
    out = jax.block_until_ready(fwd(x_tm, prepared))

    ref = reference_forward(x, params)
    assert out.shape == (BATCH, OUT)
    assert jnp.allclose(out, ref, atol=2e-3, rtol=2e-3), "mismatch vs reference"

    print("KERNEL_OK")
</pallas_src>

<mosaic_0001>
module attributes {stable_mosaic.version = 11 : i64} {
  func.func @_audio2kp_kernel(%arg0: memref<8x8x32xf32, #tpu.memory_space<vmem>>, %arg1: memref<32x128xbf16, #tpu.memory_space<vmem>>, %arg2: memref<32x128xbf16, #tpu.memory_space<vmem>>, %arg3: memref<1x128xf32, #tpu.memory_space<vmem>>, %arg4: memref<32x16xbf16, #tpu.memory_space<vmem>>, %arg5: memref<1x16xf32, #tpu.memory_space<vmem>>, %arg6: memref<8x16xf32, #tpu.memory_space<vmem>>) attributes {dimension_semantics = [], scalar_prefetch = 0 : i64, scratch_operands = 0 : i64, tpu.core_type = #tpu.core_type<tc>} {
    %c0 = arith.constant 0 : index
    %c0_0 = arith.constant 0 : index
    %c0_1 = arith.constant 0 : index
    %0 = vector.load %arg0[%c0, %c0_0, %c0_1] : memref<8x8x32xf32, #tpu.memory_space<vmem>>, vector<8x8x32xf32>
    %1 = vector.shape_cast %0 : vector<8x8x32xf32> to vector<64x32xf32>
    %2 = arith.truncf %1 : vector<64x32xf32> to vector<64x32xbf16>
    %c0_2 = arith.constant 0 : index
    %c0_3 = arith.constant 0 : index
    %3 = vector.load %arg1[%c0_2, %c0_3] : memref<32x128xbf16, #tpu.memory_space<vmem>>, vector<32x128xbf16>
    %cst = arith.constant dense<0.000000e+00> : vector<64x128xf32>
    %4 = tpu.matmul %2, %3, %cst {dimension_numbers = #tpu.dot_dimension_numbers<[1], [0], [0], [1], [0, 0, 1, 1], [], []>} : vector<64x32xbf16>, vector<32x128xbf16>, vector<64x128xf32> -> vector<64x128xf32>
    %c0_4 = arith.constant 0 : index
    %c0_5 = arith.constant 0 : index
    %5 = vector.load %arg3[%c0_4, %c0_5] : memref<1x128xf32, #tpu.memory_space<vmem>>, vector<1x128xf32>
    %6 = vector.broadcast %5 : vector<1x128xf32> to vector<64x128xf32>
    %7 = arith.addf %4, %6 : vector<64x128xf32>
    %8 = vector.shape_cast %7 : vector<64x128xf32> to vector<8x8x128xf32>
    %c0_6 = arith.constant 0 : index
    %c0_7 = arith.constant 0 : index
    %9 = vector.load %arg2[%c0_6, %c0_7] : memref<32x128xbf16, #tpu.memory_space<vmem>>, vector<32x128xbf16>
    %cst_8 = arith.constant 0.000000e+00 : f32
    %10 = vector.broadcast %cst_8 : f32 to vector<8x32xf32>
    %cst_9 = arith.constant 0.000000e+00 : f32
    %11 = vector.broadcast %cst_9 : f32 to vector<8x32xf32>
    %12 = vector.extract_strided_slice %8 {offsets = [0, 0, 0], sizes = [1, 8, 128], strides = [1, 1, 1]} : vector<8x8x128xf32> to vector<1x8x128xf32>
    %13 = vector.shape_cast %12 : vector<1x8x128xf32> to vector<8x128xf32>
    %14 = arith.truncf %10 : vector<8x32xf32> to vector<8x32xbf16>
    %cst_10 = arith.constant dense<0.000000e+00> : vector<8x128xf32>
    %15 = tpu.matmul %14, %9, %cst_10 {dimension_numbers = #tpu.dot_dimension_numbers<[1], [0], [0], [1], [0, 0, 1, 1], [], []>} : vector<8x32xbf16>, vector<32x128xbf16>, vector<8x128xf32> -> vector<8x128xf32>
    %16 = arith.addf %13, %15 : vector<8x128xf32>
    %17 = vector.extract_strided_slice %16 {offsets = [0, 0], sizes = [8, 96], strides = [1, 1]} : vector<8x128xf32> to vector<8x96xf32>
    %18 = arith.negf %17 : vector<8x96xf32>
    %19 = math.exp %18 : vector<8x96xf32>
    %cst_11 = arith.constant 1.000000e+00 : f32
    %20 = vector.broadcast %cst_11 : f32 to vector<8x96xf32>
    %21 = arith.addf %20, %19 : vector<8x96xf32>
    %22 = arith.divf %20, %21 : vector<8x96xf32>
    %23 = vector.extract_strided_slice %22 {offsets = [0, 0], sizes = [8, 32], strides = [1, 1]} : vector<8x96xf32> to vector<8x32xf32>
    %24 = vector.extract_strided_slice %22 {offsets = [0, 32], sizes = [8, 32], strides = [1, 1]} : vector<8x96xf32> to vector<8x32xf32>
    %25 = vector.extract_strided_slice %22 {offsets = [0, 64], sizes = [8, 32], strides = [1, 1]} : vector<8x96xf32> to vector<8x32xf32>
    %26 = vector.extract_strided_slice %16 {offsets = [0, 96], sizes = [8, 32], strides = [1, 1]} : vector<8x128xf32> to vector<8x32xf32>
    %27 = math.tanh %26 : vector<8x32xf32>
    %28 = arith.mulf %24, %11 : vector<8x32xf32>
    %29 = arith.mulf %23, %27 : vector<8x32xf32>
    %30 = arith.addf %28, %29 : vector<8x32xf32>
    %31 = math.tanh %30 : vector<8x32xf32>
    %32 = arith.mulf %25, %31 : vector<8x32xf32>
    %33 = vector.extract_strided_slice %8 {offsets = [1, 0, 0], sizes = [1, 8, 128], strides = [1, 1, 1]} : vector<8x8x128xf32> to vector<1x8x128xf32>
    %34 = vector.shape_cast %33 : vector<1x8x128xf32> to vector<8x128xf32>
    %35 = arith.truncf %32 : vector<8x32xf32> to vector<8x32xbf16>
    %cst_12 = arith.constant dense<0.000000e+00> : vector<8x128xf32>
    %36 = tpu.matmul %35, %9, %cst_12 {dimension_numbers = #tpu.dot_dimension_numbers<[1], [0], [0], [1], [0, 0, 1, 1], [], []>} : vector<8x32xbf16>, vector<32x128xbf16>, vector<8x128xf32> -> vector<8x128xf32>
    %37 = arith.addf %34, %36 : vector<8x128xf32>
    %38 = vector.extract_strided_slice %37 {offsets = [0, 0], sizes = [8, 96], strides = [1, 1]} : vector<8x128xf32> to vector<8x96xf32>
    %39 = arith.negf %38 : vector<8x96xf32>
    %40 = math.exp %39 : vector<8x96xf32>
    %cst_13 = arith.constant 1.000000e+00 : f32
    %41 = vector.broadcast %cst_13 : f32 to vector<8x96xf32>
    %42 = arith.addf %41, %40 : vector<8x96xf32>
    %43 = arith.divf %41, %42 : vector<8x96xf32>
    %44 = vector.extract_strided_slice %43 {offsets = [0, 0], sizes = [8, 32], strides = [1, 1]} : vector<8x96xf32> to vector<8x32xf32>
    %45 = vector.extract_strided_slice %43 {offsets = [0, 32], sizes = [8, 32], strides = [1, 1]} : vector<8x96xf32> to vector<8x32xf32>
    %46 = vector.extract_strided_slice %43 {offsets = [0, 64], sizes = [8, 32], strides = [1, 1]} : vector<8x96xf32> to vector<8x32xf32>
    %47 = vector.extract_strided_slice %37 {offsets = [0, 96], sizes = [8, 32], strides = [1, 1]} : vector<8x128xf32> to vector<8x32xf32>
    %48 = math.tanh %47 : vector<8x32xf32>
    %49 = arith.mulf %45, %30 : vector<8x32xf32>
    %50 = arith.mulf %44, %48 : vector<8x32xf32>
    %51 = arith.addf %49, %50 : vector<8x32xf32>
    %52 = math.tanh %51 : vector<8x32xf32>
    %53 = arith.mulf %46, %52 : vector<8x32xf32>
    %54 = vector.extract_strided_slice %8 {offsets = [2, 0, 0], sizes = [1, 8, 128], strides = [1, 1, 1]} : vector<8x8x128xf32> to vector<1x8x128xf32>
    %55 = vector.shape_cast %54 : vector<1x8x128xf32> to vector<8x128xf32>
    %56 = arith.truncf %53 : vector<8x32xf32> to vector<8x32xbf16>
    %cst_14 = arith.constant dense<0.000000e+00> : vector<8x128xf32>
    %57 = tpu.matmul %56, %9, %cst_14 {dimension_numbers = #tpu.dot_dimension_numbers<[1], [0], [0], [1], [0, 0, 1, 1], [], []>} : vector<8x32xbf16>, vector<32x128xbf16>, vector<8x128xf32> -> vector<8x128xf32>
    %58 = arith.addf %55, %57 : vector<8x128xf32>
    %59 = vector.extract_strided_slice %58 {offsets = [0, 0], sizes = [8, 96], strides = [1, 1]} : vector<8x128xf32> to vector<8x96xf32>
    %60 = arith.negf %59 : vector<8x96xf32>
    %61 = math.exp %60 : vector<8x96xf32>
    %cst_15 = arith.constant 1.000000e+00 : f32
    %62 = vector.broadcast %cst_15 : f32 to vector<8x96xf32>
    %63 = arith.addf %62, %61 : vector<8x96xf32>
    %64 = arith.divf %62, %63 : vector<8x96xf32>
    %65 = vector.extract_strided_slice %64 {offsets = [0, 0], sizes = [8, 32], strides = [1, 1]} : vector<8x96xf32> to vector<8x32xf32>
    %66 = vector.extract_strided_slice %64 {offsets = [0, 32], sizes = [8, 32], strides = [1, 1]} : vector<8x96xf32> to vector<8x32xf32>
    %67 = vector.extract_strided_slice %64 {offsets = [0, 64], sizes = [8, 32], strides = [1, 1]} : vector<8x96xf32> to vector<8x32xf32>
    %68 = vector.extract_strided_slice %58 {offsets = [0, 96], sizes = [8, 32], strides = [1, 1]} : vector<8x128xf32> to vector<8x32xf32>
    %69 = math.tanh %68 : vector<8x32xf32>
    %70 = arith.mulf %66, %51 : vector<8x32xf32>
    %71 = arith.mulf %65, %69 : vector<8x32xf32>
    %72 = arith.addf %70, %71 : vector<8x32xf32>
    %73 = math.tanh %72 : vector<8x32xf32>
    %74 = arith.mulf %67, %73 : vector<8x32xf32>
    %75 = vector.extract_strided_slice %8 {offsets = [3, 0, 0], sizes = [1, 8, 128], strides = [1, 1, 1]} : vector<8x8x128xf32> to vector<1x8x128xf32>
    %76 = vector.shape_cast %75 : vector<1x8x128xf32> to vector<8x128xf32>
    %77 = arith.truncf %74 : vector<8x32xf32> to vector<8x32xbf16>
    %cst_16 = arith.constant dense<0.000000e+00> : vector<8x128xf32>
    %78 = tpu.matmul %77, %9, %cst_16 {dimension_numbers = #tpu.dot_dimension_numbers<[1], [0], [0], [1], [0, 0, 1, 1], [], []>} : vector<8x32xbf16>, vector<32x128xbf16>, vector<8x128xf32> -> vector<8x128xf32>
    %79 = arith.addf %76, %78 : vector<8x128xf32>
    %80 = vector.extract_strided_slice %79 {offsets = [0, 0], sizes = [8, 96], strides = [1, 1]} : vector<8x128xf32> to vector<8x96xf32>
    %81 = arith.negf %80 : vector<8x96xf32>
    %82 = math.exp %81 : vector<8x96xf32>
    %cst_17 = arith.constant 1.000000e+00 : f32
    %83 = vector.broadcast %cst_17 : f32 to vector<8x96xf32>
    %84 = arith.addf %83, %82 : vector<8x96xf32>
    %85 = arith.divf %83, %84 : vector<8x96xf32>
    %86 = vector.extract_strided_slice %85 {offsets = [0, 0], sizes = [8, 32], strides = [1, 1]} : vector<8x96xf32> to vector<8x32xf32>
    %87 = vector.extract_strided_slice %85 {offsets = [0, 32], sizes = [8, 32], strides = [1, 1]} : vector<8x96xf32> to vector<8x32xf32>
    %88 = vector.extract_strided_slice %85 {offsets = [0, 64], sizes = [8, 32], strides = [1, 1]} : vector<8x96xf32> to vector<8x32xf32>
    %89 = vector.extract_strided_slice %79 {offsets = [0, 96], sizes = [8, 32], strides = [1, 1]} : vector<8x128xf32> to vector<8x32xf32>
    %90 = math.tanh %89 : vector<8x32xf32>
    %91 = arith.mulf %87, %72 : vector<8x32xf32>
    %92 = arith.mulf %86, %90 : vector<8x32xf32>
    %93 = arith.addf %91, %92 : vector<8x32xf32>
    %94 = math.tanh %93 : vector<8x32xf32>
    %95 = arith.mulf %88, %94 : vector<8x32xf32>
    %96 = vector.extract_strided_slice %8 {offsets = [4, 0, 0], sizes = [1, 8, 128], strides = [1, 1, 1]} : vector<8x8x128xf32> to vector<1x8x128xf32>
    %97 = vector.shape_cast %96 : vector<1x8x128xf32> to vector<8x128xf32>
    %98 = arith.truncf %95 : vector<8x32xf32> to vector<8x32xbf16>
    %cst_18 = arith.constant dense<0.000000e+00> : vector<8x128xf32>
    %99 = tpu.matmul %98, %9, %cst_18 {dimension_numbers = #tpu.dot_dimension_numbers<[1], [0], [0], [1], [0, 0, 1, 1], [], []>} : vector<8x32xbf16>, vector<32x128xbf16>, vector<8x128xf32> -> vector<8x128xf32>
    %100 = arith.addf %97, %99 : vector<8x128xf32>
    %101 = vector.extract_strided_slice %100 {offsets = [0, 0], sizes = [8, 96], strides = [1, 1]} : vector<8x128xf32> to vector<8x96xf32>
    %102 = arith.negf %101 : vector<8x96xf32>
    %103 = math.exp %102 : vector<8x96xf32>
    %cst_19 = arith.constant 1.000000e+00 : f32
    %104 = vector.broadcast %cst_19 : f32 to vector<8x96xf32>
    %105 = arith.addf %104, %103 : vector<8x96xf32>
    %106 = arith.divf %104, %105 : vector<8x96xf32>
    %107 = vector.extract_strided_slice %106 {offsets = [0, 0], sizes = [8, 32], strides = [1, 1]} : vector<8x96xf32> to vector<8x32xf32>
    %108 = vector.extract_strided_slice %106 {offsets = [0, 32], sizes = [8, 32], strides = [1, 1]} : vector<8x96xf32> to vector<8x32xf32>
    %109 = vector.extract_strided_slice %106 {offsets = [0, 64], sizes = [8, 32], strides = [1, 1]} : vector<8x96xf32> to vector<8x32xf32>
    %110 = vector.extract_strided_slice %100 {offsets = [0, 96], sizes = [8, 32], strides = [1, 1]} : vector<8x128xf32> to vector<8x32xf32>
    %111 = math.tanh %110 : vector<8x32xf32>
    %112 = arith.mulf %108, %93 : vector<8x32xf32>
    %113 = arith.mulf %107, %111 : vector<8x32xf32>
    %114 = arith.addf %112, %113 : vector<8x32xf32>
    %115 = math.tanh %114 : vector<8x32xf32>
    %116 = arith.mulf %109, %115 : vector<8x32xf32>
    %117 = vector.extract_strided_slice %8 {offsets = [5, 0, 0], sizes = [1, 8, 128], strides = [1, 1, 1]} : vector<8x8x128xf32> to vector<1x8x128xf32>
    %118 = vector.shape_cast %117 : vector<1x8x128xf32> to vector<8x128xf32>
    %119 = arith.truncf %116 : vector<8x32xf32> to vector<8x32xbf16>
    %cst_20 = arith.constant dense<0.000000e+00> : vector<8x128xf32>
    %120 = tpu.matmul %119, %9, %cst_20 {dimension_numbers = #tpu.dot_dimension_numbers<[1], [0], [0], [1], [0, 0, 1, 1], [], []>} : vector<8x32xbf16>, vector<32x128xbf16>, vector<8x128xf32> -> vector<8x128xf32>
    %121 = arith.addf %118, %120 : vector<8x128xf32>
    %122 = vector.extract_strided_slice %121 {offsets = [0, 0], sizes = [8, 96], strides = [1, 1]} : vector<8x128xf32> to vector<8x96xf32>
    %123 = arith.negf %122 : vector<8x96xf32>
    %124 = math.exp %123 : vector<8x96xf32>
    %cst_21 = arith.constant 1.000000e+00 : f32
    %125 = vector.broadcast %cst_21 : f32 to vector<8x96xf32>
    %126 = arith.addf %125, %124 : vector<8x96xf32>
    %127 = arith.divf %125, %126 : vector<8x96xf32>
    %128 = vector.extract_strided_slice %127 {offsets = [0, 0], sizes = [8, 32], strides = [1, 1]} : vector<8x96xf32> to vector<8x32xf32>
    %129 = vector.extract_strided_slice %127 {offsets = [0, 32], sizes = [8, 32], strides = [1, 1]} : vector<8x96xf32> to vector<8x32xf32>
    %130 = vector.extract_strided_slice %127 {offsets = [0, 64], sizes = [8, 32], strides = [1, 1]} : vector<8x96xf32> to vector<8x32xf32>
    %131 = vector.extract_strided_slice %121 {offsets = [0, 96], sizes = [8, 32], strides = [1, 1]} : vector<8x128xf32> to vector<8x32xf32>
    %132 = math.tanh %131 : vector<8x32xf32>
    %133 = arith.mulf %129, %114 : vector<8x32xf32>
    %134 = arith.mulf %128, %132 : vector<8x32xf32>
    %135 = arith.addf %133, %134 : vector<8x32xf32>
    %136 = math.tanh %135 : vector<8x32xf32>
    %137 = arith.mulf %130, %136 : vector<8x32xf32>
    %138 = vector.extract_strided_slice %8 {offsets = [6, 0, 0], sizes = [1, 8, 128], strides = [1, 1, 1]} : vector<8x8x128xf32> to vector<1x8x128xf32>
    %139 = vector.shape_cast %138 : vector<1x8x128xf32> to vector<8x128xf32>
    %140 = arith.truncf %137 : vector<8x32xf32> to vector<8x32xbf16>
    %cst_22 = arith.constant dense<0.000000e+00> : vector<8x128xf32>
    %141 = tpu.matmul %140, %9, %cst_22 {dimension_numbers = #tpu.dot_dimension_numbers<[1], [0], [0], [1], [0, 0, 1, 1], [], []>} : vector<8x32xbf16>, vector<32x128xbf16>, vector<8x128xf32> -> vector<8x128xf32>
    %142 = arith.addf %139, %141 : vector<8x128xf32>
    %143 = vector.extract_strided_slice %142 {offsets = [0, 0], sizes = [8, 96], strides = [1, 1]} : vector<8x128xf32> to vector<8x96xf32>
    %144 = arith.negf %143 : vector<8x96xf32>
    %145 = math.exp %144 : vector<8x96xf32>
    %cst_23 = arith.constant 1.000000e+00 : f32
    %146 = vector.broadcast %cst_23 : f32 to vector<8x96xf32>
    %147 = arith.addf %146, %145 : vector<8x96xf32>
    %148 = arith.divf %146, %147 : vector<8x96xf32>
    %149 = vector.extract_strided_slice %148 {offsets = [0, 0], sizes = [8, 32], strides = [1, 1]} : vector<8x96xf32> to vector<8x32xf32>
    %150 = vector.extract_strided_slice %148 {offsets = [0, 32], sizes = [8, 32], strides = [1, 1]} : vector<8x96xf32> to vector<8x32xf32>
    %151 = vector.extract_strided_slice %148 {offsets = [0, 64], sizes = [8, 32], strides = [1, 1]} : vector<8x96xf32> to vector<8x32xf32>
    %152 = vector.extract_strided_slice %142 {offsets = [0, 96], sizes = [8, 32], strides = [1, 1]} : vector<8x128xf32> to vector<8x32xf32>
    %153 = math.tanh %152 : vector<8x32xf32>
    %154 = arith.mulf %150, %135 : vector<8x32xf32>
    %155 = arith.mulf %149, %153 : vector<8x32xf32>
    %156 = arith.addf %154, %155 : vector<8x32xf32>
    %157 = math.tanh %156 : vector<8x32xf32>
    %158 = arith.mulf %151, %157 : vector<8x32xf32>
    %159 = vector.extract_strided_slice %8 {offsets = [7, 0, 0], sizes = [1, 8, 128], strides = [1, 1, 1]} : vector<8x8x128xf32> to vector<1x8x128xf32>
    %160 = vector.shape_cast %159 : vector<1x8x128xf32> to vector<8x128xf32>
    %161 = arith.truncf %158 : vector<8x32xf32> to vector<8x32xbf16>
    %cst_24 = arith.constant dense<0.000000e+00> : vector<8x128xf32>
    %162 = tpu.matmul %161, %9, %cst_24 {dimension_numbers = #tpu.dot_dimension_numbers<[1], [0], [0], [1], [0, 0, 1, 1], [], []>} : vector<8x32xbf16>, vector<32x128xbf16>, vector<8x128xf32> -> vector<8x128xf32>
    %163 = arith.addf %160, %162 : vector<8x128xf32>
    %164 = vector.extract_strided_slice %163 {offsets = [0, 0], sizes = [8, 96], strides = [1, 1]} : vector<8x128xf32> to vector<8x96xf32>
    %165 = arith.negf %164 : vector<8x96xf32>
    %166 = math.exp %165 : vector<8x96xf32>
    %cst_25 = arith.constant 1.000000e+00 : f32
    %167 = vector.broadcast %cst_25 : f32 to vector<8x96xf32>
    %168 = arith.addf %167, %166 : vector<8x96xf32>
    %169 = arith.divf %167, %168 : vector<8x96xf32>
    %170 = vector.extract_strided_slice %169 {offsets = [0, 0], sizes = [8, 32], strides = [1, 1]} : vector<8x96xf32> to vector<8x32xf32>
    %171 = vector.extract_strided_slice %169 {offsets = [0, 32], sizes = [8, 32], strides = [1, 1]} : vector<8x96xf32> to vector<8x32xf32>
    %172 = vector.extract_strided_slice %169 {offsets = [0, 64], sizes = [8, 32], strides = [1, 1]} : vector<8x96xf32> to vector<8x32xf32>
    %173 = vector.extract_strided_slice %163 {offsets = [0, 96], sizes = [8, 32], strides = [1, 1]} : vector<8x128xf32> to vector<8x32xf32>
    %174 = math.tanh %173 : vector<8x32xf32>
    %175 = arith.mulf %171, %156 : vector<8x32xf32>
    %176 = arith.mulf %170, %174 : vector<8x32xf32>
    %177 = arith.addf %175, %176 : vector<8x32xf32>
    %178 = math.tanh %177 : vector<8x32xf32>
    %179 = arith.mulf %172, %178 : vector<8x32xf32>
    %180 = arith.truncf %179 : vector<8x32xf32> to vector<8x32xbf16>
    %c0_26 = arith.constant 0 : index
    %c0_27 = arith.constant 0 : index
    %181 = vector.load %arg4[%c0_26, %c0_27] : memref<32x16xbf16, #tpu.memory_space<vmem>>, vector<32x16xbf16>
    %cst_28 = arith.constant dense<0.000000e+00> : vector<8x16xf32>
    %182 = tpu.matmul %180, %181, %cst_28 {dimension_numbers = #tpu.dot_dimension_numbers<[1], [0], [0], [1], [0, 0, 1, 1], [], []>} : vector<8x32xbf16>, vector<32x16xbf16>, vector<8x16xf32> -> vector<8x16xf32>
    %c0_29 = arith.constant 0 : index
    %c0_30 = arith.constant 0 : index
    %183 = vector.load %arg5[%c0_29, %c0_30] : memref<1x16xf32, #tpu.memory_space<vmem>>, vector<1x16xf32>
    %184 = vector.broadcast %183 : vector<1x16xf32> to vector<8x16xf32>
    %185 = arith.addf %182, %184 : vector<8x16xf32>
    %c0_31 = arith.constant 0 : index
    %c0_32 = arith.constant 0 : index
    %186 = vector.load %arg6[%c0_31, %c0_32] : memref<8x16xf32, #tpu.memory_space<vmem>>, vector<8x16xf32>
    tpu.vector_store %arg6[%c0_31, %c0_32], %185 {strides = array<i32>} : memref<8x16xf32, #tpu.memory_space<vmem>>, vector<8x16xf32>,
    return
  }
}

</mosaic_0001>

<llo_original>
// kernel: audio2kp_forward.1
$region0: #{audio2kp_forward.1}
  #allocation0 [shape = 'u32[]', space=smem, size = 0x4, offset = 0x4, fixed_abs, tag = 'smem constant byte address 0x4 - core index']
  #allocation1 [shape = 'u32[144,128]{1,0:T(1,128)}', space=vmem, size = 0x12000, scoped, tag = 'internal scratch']
  %s0 = inlined_call_operand.hbm [shape: f32[8,8,32], index: 0, kind: input, shape index: {}]
  %s1 = inlined_call_operand.vmem [shape: bf16[32,128], index: 1, kind: input, shape index: {}]
  %s2 = inlined_call_operand.hbm [shape: bf16[32,128], index: 2, kind: input, shape index: {}]
  %s3 = inlined_call_operand.vmem [shape: f32[1,128], index: 3, kind: input, shape index: {}]
  %s4 = inlined_call_operand.vmem [shape: bf16[32,16], index: 4, kind: input, shape index: {}]
  %s5 = inlined_call_operand.vmem [shape: f32[1,16], index: 5, kind: input, shape index: {}]
  %s6 = inlined_call_operand.hbm [shape: f32[8,16], index: 6, kind: output, shape index: {}]
  %s7 = sld [smem:[#allocation0]]
  $region42: #{audio2kp_forward.1} parent=0
    _
  %s9 = ssub.s32 1, %s7
  %s10 = scalar_select 0, %s9, %s7
  $region1: #{audio2kp_forward.1} parent=0
    #allocation2 [shape = 'u8[32768]{0}', space=vmem, size = 0x8000, scoped, tag = 'input window, operand 0, single buffered']
    #allocation3 [shape = 's32[1]{0}', space=sflag, size = 0x4, scoped, tag = 'scoped memory for audio2kp_forward.1']
    #allocation4 [shape = 's32[1]{0}', space=sflag, size = 0x4, scoped, tag = 'scoped memory for audio2kp_forward.1']
    #allocation5 [shape = 'u8[8192]{0}', space=vmem, size = 0x2000, scoped, tag = 'input window, operand 2, single buffered']
    #allocation6 [shape = 's32[1]{0}', space=sflag, size = 0x4, scoped, tag = 'scoped memory for audio2kp_forward.1']
    #allocation7 [shape = 'u8[4096]{0}', space=vmem, size = 0x1000, scoped, tag = 'output window, operand 0, single buffered']
    %11 = vsyncpa [#allocation3], 0
    %12 = vsyncpa [#allocation6], 0
    %13 = vsyncpa [#allocation4], 0
    // Predicated region
    $region2: #{audio2kp_forward.1} parent=1 // pred_check
      _
    $region3: #{audio2kp_forward.1} parent=1 // pred_check_branch
      %15 = sbr.rel (0) target = $region5
    $region4: #{audio2kp_forward.1} parent=1 // pred_region
      %s17 = ssub.s32 1024, 1024
      %18 = vsyncadd [#allocation3], %s17
      %s19 = sshll.u32 [#allocation2], 4
      %s20 = int_to_ptr.vmem [resolvable:$true] %s19
      %25 = dma.hbm_to_vmem [thread:$0]  %s0, 1024, %s20, [#allocation3], 128, 128, 8
    $region5: #{audio2kp_forward.1} parent=1 // pred_fallthru
      _
    // Predicated region
    $region6: #{audio2kp_forward.1} parent=1 // pred_check
      _
    $region7: #{audio2kp_forward.1} parent=1 // pred_check_branch
      %27 = sbr.rel (0) target = $region9
    $region8: #{audio2kp_forward.1} parent=1 // pred_region
      _
    $region9: #{audio2kp_forward.1} parent=1 // pred_fallthru
      _
    // Predicated region
    $region10: #{audio2kp_forward.1} parent=1 // pred_check
      _
    $region11: #{audio2kp_forward.1} parent=1 // pred_check_branch
      %29 = sbr.rel (0) target = $region13
    $region12: #{audio2kp_forward.1} parent=1 // pred_region
      %s31 = ssub.s32 256, 256
      %32 = vsyncadd [#allocation6], %s31
      %s33 = sshll.u32 [#allocation5], 4
      %s34 = int_to_ptr.vmem [resolvable:$true] %s33
      %39 = dma.hbm_to_vmem [thread:$0]  %s2, 256, %s34, [#allocation6], 64, 64, 4
    $region13: #{audio2kp_forward.1} parent=1 // pred_fallthru
      _
    // Predicated region
    $region14: #{audio2kp_forward.1} parent=1 // pred_check
      _
    $region15: #{audio2kp_forward.1} parent=1 // pred_check_branch
      %41 = sbr.rel (0) target = $region17
    $region16: #{audio2kp_forward.1} parent=1 // pred_region
      _
    $region17: #{audio2kp_forward.1} parent=1 // pred_fallthru
      _
    // Predicated region
    $region18: #{audio2kp_forward.1} parent=1 // pred_check
      _
    $region19: #{audio2kp_forward.1} parent=1 // pred_check_branch
      %43 = sbr.rel (0) target = $region21
    $region20: #{audio2kp_forward.1} parent=1 // pred_region
      _
    $region21: #{audio2kp_forward.1} parent=1 // pred_fallthru
      _
    // Predicated region
    $region22: #{audio2kp_forward.1} parent=1 // pred_check
      _
    $region23: #{audio2kp_forward.1} parent=1 // pred_check_branch
      %45 = sbr.rel (0) target = $region25
    $region24: #{audio2kp_forward.1} parent=1 // pred_region
      _
    $region25: #{audio2kp_forward.1} parent=1 // pred_fallthru
      _
    // Predicated region
    $region26: #{audio2kp_forward.1} parent=1 // pred_check
      _
    $region27: #{audio2kp_forward.1} parent=1 // pred_check_branch
      %47 = sbr.rel (0) target = $region29
    $region28: #{audio2kp_forward.1} parent=1 // pred_region
      %48 = dma.done [#allocation3], 1024
    $region29: #{audio2kp_forward.1} parent=1 // pred_fallthru
      _
    // Predicated region
    $region30: #{audio2kp_forward.1} parent=1 // pred_check
      _
    $region31: #{audio2kp_forward.1} parent=1 // pred_check_branch
      %50 = sbr.rel (0) target = $region33
    $region32: #{audio2kp_forward.1} parent=1 // pred_region
      %51 = dma.done [#allocation6], 256
    $region33: #{audio2kp_forward.1} parent=1 // pred_fallthru
      _
    %v53 = vld [vmem:[#allocation2] sm:$0xff]
    %v54 = vld [vmem:[#allocation2 + $0x8] sm:$0xff]
    %v55 = vld [vmem:[#allocation2 + $0x10] sm:$0xff]
    %v56 = vld [vmem:[#allocation2 + $0x18] sm:$0xff]
    %v57 = vld [vmem:[#allocation2 + $0x20] sm:$0xff]
    %v58 = vld [vmem:[#allocation2 + $0x28] sm:$0xff]
    %v59 = vld [vmem:[#allocation2 + $0x30] sm:$0xff]
    %v60 = vld [vmem:[#allocation2 + $0x38] sm:$0xff]
    %v61 = vpack.c.bf16 %v54, %v53
    %v62 = vpack.c.bf16 %v56, %v55
    %v63 = vpack.c.bf16 %v58, %v57
    %v64 = vpack.c.bf16 %v60, %v59
    %v65 = vld [vmem:[%s1] sm:$0xf]
    %v66 = vld [vmem:[%s1 + $0x4] sm:$0xf]
    %v67 = vld [vmem:[%s1 + $0x8] sm:$0xf]
    %v68 = vld [vmem:[%s1 + $0xc] sm:$0xf]
    %v69 = vld [vmem:[%s3] sm:$0x1]
    %v71 = vlaneseq
    %v72 = vshrl.u32 %v71, 7
    %v73 = vsub.s32 0, %v72
    %v74 = vrot.slane %v69, %v73
    %v80 = vunpack.c.l.b16 %v65
    %v81 = vunpack.c.l.b16 %v66
    %v82 = vunpack.c.l.b16 %v67
    %v83 = vunpack.c.l.b16 %v68
    %v84 = vpack.c.b16 %v81, %v80
    %v85 = vpack.c.b16 %v83, %v82
    %vm88 = vcmask 261120
    %v90 = vsel %vm88, %v61, 0
    %v93 = vsel %vm88, %v62, 0
    %v96 = vsel %vm88, %v63, 0
    %v99 = vsel %vm88, %v64, 0
    %101 = vmatprep.subr.bf16.mxu0 0
    %102 = vmatpush1.bf16.msra.mxu0 0
    %103 = vmatprep.subr.bf16.mxu0 0
    %104 = vmatpush1.bf16.msra.mxu0 0
    %105 = vmatprep.subr.bf16.mxu0 0
    %106 = vmatpush1.bf16.msra.mxu0 0
    %107 = vmatprep.subr.bf16.mxu0 0
    %108 = vmatpush1.bf16.msra.mxu0 0
    %109 = vmatprep.subr.bf16.mxu0 0
    %110 = vmatpush1.bf16.msra.mxu0 0
    %111 = vmatprep.subr.bf16.mxu0 0
    %112 = vmatpush1.bf16.msra.mxu0 0
    %113 = vmatprep.subr.bf16.mxu0 0
    %114 = vmatpush1.bf16.msra.mxu0 %v85
    %115 = vmatprep.subr.bf16.mxu0 0
    %116 = vmatpush1.bf16.msra.mxu0 %v84
    %117 = vmatprep.subr.bf16.mxu0 0
    %118 = vmatpush2.bf16.msra.mxu0 0
    %119 = vmatprep.subr.bf16.mxu0 0
    %120 = vmatpush2.bf16.msra.mxu0 0
    %121 = vmatprep.subr.bf16.mxu0 0
    %122 = vmatpush2.bf16.msra.mxu0 0
    %123 = vmatprep.subr.bf16.mxu0 0
    %124 = vmatpush2.bf16.msra.mxu0 0
    %125 = vmatprep.subr.bf16.mxu0 0
    %126 = vmatpush2.bf16.msra.mxu0 0
    %127 = vmatprep.subr.bf16.mxu0 0
    %128 = vmatpush2.bf16.msra.mxu0 0
    %129 = vmatprep.subr.bf16.mxu0 0
    %130 = vmatpush2.bf16.msra.mxu0 0
    %131 = vmatprep.subr.bf16.mxu0 0
    %132 = vmatpush2.bf16.msra.mxu0 0
    %133 = vmatprep.mubr.bf16.mxu0 0
    %134 = vmatmul.mubr.bf16.gmra.mxu0 %v90
    %v135 = vpop.f32.mrf.mxu0
    %v136 = vadd.f32 %v74, %v135
    %v137 = vpop.f32.mrf.mxu0
    %v138 = vpop.f32.mrf.mxu0
    %v139 = vadd.f32 %v74, %v138
    %v140 = vpop.f32.mrf.mxu0
    %141 = vmatprep.mubr.bf16.mxu0 0
    %142 = vmatmul.mubr.bf16.gmra.mxu0 %v93
    %v143 = vpop.f32.mrf.mxu0
    %v144 = vadd.f32 %v74, %v143
    %v145 = vpop.f32.mrf.mxu0
    %v146 = vpop.f32.mrf.mxu0
    %v147 = vadd.f32 %v74, %v146
    %v148 = vpop.f32.mrf.mxu0
    %149 = vmatprep.mubr.bf16.mxu0 0
    %150 = vmatmul.mubr.bf16.gmra.mxu0 %v96
    %v151 = vpop.f32.mrf.mxu0
    %v152 = vadd.f32 %v74, %v151
    %v153 = vpop.f32.mrf.mxu0
    %v154 = vpop.f32.mrf.mxu0
    %v155 = vadd.f32 %v74, %v154
    %v156 = vpop.f32.mrf.mxu0
    %157 = vmatprep.mubr.bf16.mxu0 0
    %158 = vmatmul.mubr.bf16.gmra.mxu0 %v99
    %v159 = vpop.f32.mrf.mxu0
    %v160 = vadd.f32 %v74, %v159
    %v161 = vpop.f32.mrf.mxu0
    %v162 = vpop.f32.mrf.mxu0
    %v163 = vadd.f32 %v74, %v162
    %v164 = vpop.f32.mrf.mxu0
    %165 = vdwg.mxu0
    %v166 = vld [vmem:[#allocation5] sm:$0xf]
    %v167 = vld [vmem:[#allocation5 + $0x4] sm:$0xf]
    %v168 = vld [vmem:[#allocation5 + $0x8] sm:$0xf]
    %v169 = vld [vmem:[#allocation5 + $0xc] sm:$0xf]
    %v174 = vunpack.c.l.b16 %v166
    %v175 = vunpack.c.l.b16 %v167
    %v176 = vunpack.c.l.b16 %v168
    %v177 = vunpack.c.l.b16 %v169
    %v178 = vpack.c.b16 %v175, %v174
    %v179 = vpack.c.b16 %v177, %v176
    %v183 = vsel %vm88, 0, 0
    %185 = vmatprep.subr.bf16.mxu0 0
    %186 = vmatpush1.bf16.msra.mxu0 0
    %187 = vmatprep.subr.bf16.mxu0 0
    %188 = vmatpush1.bf16.msra.mxu0 0
    %189 = vmatprep.subr.bf16.mxu0 0
    %190 = vmatpush1.bf16.msra.mxu0 0
    %191 = vmatprep.subr.bf16.mxu0 0
    %192 = vmatpush1.bf16.msra.mxu0 0
    %193 = vmatprep.subr.bf16.mxu0 0
    %194 = vmatpush1.bf16.msra.mxu0 0
    %195 = vmatprep.subr.bf16.mxu0 0
    %196 = vmatpush1.bf16.msra.mxu0 0
    %197 = vmatprep.subr.bf16.mxu0 0
    %198 = vmatpush1.bf16.msra.mxu0 %v179
    %199 = vmatprep.subr.bf16.mxu0 0
    %200 = vmatpush1.bf16.msra.mxu0 %v178
    %201 = vmatprep.subr.bf16.mxu0 0
    %202 = vmatpush2.bf16.msra.mxu0 0
    %203 = vmatprep.subr.bf16.mxu0 0
    %204 = vmatpush2.bf16.msra.mxu0 0
    %205 = vmatprep.subr.bf16.mxu0 0
    %206 = vmatpush2.bf16.msra.mxu0 0
    %207 = vmatprep.subr.bf16.mxu0 0
    %208 = vmatpush2.bf16.msra.mxu0 0
    %209 = vmatprep.subr.bf16.mxu0 0
    %210 = vmatpush2.bf16.msra.mxu0 0
    %211 = vmatprep.subr.bf16.mxu0 0
    %212 = vmatpush2.bf16.msra.mxu0 0
    %213 = vmatprep.subr.bf16.mxu0 0
    %214 = vmatpush2.bf16.msra.mxu0 0
    %215 = vmatprep.subr.bf16.mxu0 0
    %216 = vmatpush2.bf16.msra.mxu0 0
    %217 = vmatprep.mubr.bf16.mxu0 0
    %218 = vmatmul.mubr.bf16.gmra.mxu0 %v183
    %v219 = vpop.f32.mrf.mxu0
    %v220 = vadd.f32 0.0, %v219
    %v221 = vpop.f32.mrf.mxu0
    %v222 = vpop.f32.mrf.mxu0
    %v223 = vpop.f32.mrf.mxu0
    %224 = vdwg.mxu0
    %v225 = vadd.f32 %v136, %v220
    %v226 = vxor.u32 %v225, 2147483648
    %v227 = vmul.f32 %v226, 1.442695
    %v228 = vpow.pop %v227
    %v229 = vadd.f32 %v228, 1.0
    %v230 = vrcp.pop %v229
    %v231 = vmul.f32 1.0, %v230
    %v232 = vtanh.pop %v225
    %v233 = vmul.f32 %v231, 0.0
    %235 = vrot.lane.b32.xlu0 %v232, 32
    %v236 = vpop.permute.xlu0 %235
    %v238 = vmul.f32 %v231, %v236
    %240 = vrot.lane.b32.xlu0 %v238, 32
    %v241 = vpop.permute.xlu0 %240
    %v243 = vadd.f32 %v233, %v241
    %v244 = vtanh.pop %v243
    %246 = vrot.lane.b32.xlu0 %v244, 32
    %v247 = vpop.permute.xlu0 %246
    %v249 = vmul.f32 %v231, %v247
    %v250 = vpack.c.bf16 %v249, %v249
    %252 = vrot.lane.b32.xlu0 %v250, 64
    %v253 = vpop.permute.xlu0 %252
    %v255 = vsel %vm88, %v253, 0
    %257 = vmatprep.subr.bf16.mxu0 0
    %258 = vmatpush1.bf16.msra.mxu0 0
    %259 = vmatprep.subr.bf16.mxu0 0
    %260 = vmatpush1.bf16.msra.mxu0 0
    %261 = vmatprep.subr.bf16.mxu0 0
    %262 = vmatpush1.bf16.msra.mxu0 0
    %263 = vmatprep.subr.bf16.mxu0 0
    %264 = vmatpush1.bf16.msra.mxu0 0
    %265 = vmatprep.subr.bf16.mxu0 0
    %266 = vmatpush1.bf16.msra.mxu0 0
    %267 = vmatprep.subr.bf16.mxu0 0
    %268 = vmatpush1.bf16.msra.mxu0 0
    %269 = vmatprep.subr.bf16.mxu0 0
    %270 = vmatpush1.bf16.msra.mxu0 %v179
    %271 = vmatprep.subr.bf16.mxu0 0
    %272 = vmatpush1.bf16.msra.mxu0 %v178
    %273 = vmatprep.subr.bf16.mxu0 0
    %274 = vmatpush2.bf16.msra.mxu0 0
    %275 = vmatprep.subr.bf16.mxu0 0
    %276 = vmatpush2.bf16.msra.mxu0 0
    %277 = vmatprep.subr.bf16.mxu0 0
    %278 = vmatpush2.bf16.msra.mxu0 0
    %279 = vmatprep.subr.bf16.mxu0 0
    %280 = vmatpush2.bf16.msra.mxu0 0
    %281 = vmatprep.subr.bf16.mxu0 0
    %282 = vmatpush2.bf16.msra.mxu0 0
    %283 = vmatprep.subr.bf16.mxu0 0
    %284 = vmatpush2.bf16.msra.mxu0 0
    %285 = vmatprep.subr.bf16.mxu0 0
    %286 = vmatpush2.bf16.msra.mxu0 0
    %287 = vmatprep.subr.bf16.mxu0 0
    %288 = vmatpush2.bf16.msra.mxu0 0
    %289 = vmatprep.mubr.bf16.mxu0 0
    %290 = vmatmul.mubr.bf16.gmra.mxu0 %v255
    %v291 = vpop.f32.mrf.mxu0
    %v292 = vadd.f32 0.0, %v291
    %v293 = vpop.f32.mrf.mxu0
    %v294 = vpop.f32.mrf.mxu0
    %v295 = vpop.f32.mrf.mxu0
    %296 = vdwg.mxu0
    %v297 = vadd.f32 %v139, %v292
    %v298 = vxor.u32 %v297, 2147483648
    %v299 = vmul.f32 %v298, 1.442695
    %v300 = vpow.pop %v299
    %v301 = vadd.f32 %v300, 1.0
    %v302 = vrcp.pop %v301
    %v303 = vmul.f32 1.0, %v302
    %v304 = vtanh.pop %v297
    %v305 = vmul.f32 %v303, %v243
    %307 = vrot.lane.b32.xlu0 %v304, 32
    %v308 = vpop.permute.xlu0 %307
    %v310 = vmul.f32 %v303, %v308
    %312 = vrot.lane.b32.xlu0 %v310, 32
    %v313 = vpop.permute.xlu0 %312
    %v315 = vadd.f32 %v305, %v313
    %v316 = vtanh.pop %v315
    %318 = vrot.lane.b32.xlu0 %v316, 32
    %v319 = vpop.permute.xlu0 %318
    %v321 = vmul.f32 %v303, %v319
    %v322 = vpack.c.bf16 %v321, %v321
    %324 = vrot.lane.b32.xlu0 %v322, 64
    %v325 = vpop.permute.xlu0 %324
    %v327 = vsel %vm88, %v325, 0
    %329 = vmatprep.subr.bf16.mxu0 0
    %330 = vmatpush1.bf16.msra.mxu0 0
    %331 = vmatprep.subr.bf16.mxu0 0
    %332 = vmatpush1.bf16.msra.mxu0 0
    %333 = vmatprep.subr.bf16.mxu0 0
    %334 = vmatpush1.bf16.msra.mxu0 0
    %335 = vmatprep.subr.bf16.mxu0 0
    %336 = vmatpush1.bf16.msra.mxu0 0
    %337 = vmatprep.subr.bf16.mxu0 0
    %338 = vmatpush1.bf16.msra.mxu0 0
    %339 = vmatprep.subr.bf16.mxu0 0
    %340 = vmatpush1.bf16.msra.mxu0 0
    %341 = vmatprep.subr.bf16.mxu0 0
    %342 = vmatpush1.bf16.msra.mxu0 %v179
    %343 = vmatprep.subr.bf16.mxu0 0
    %344 = vmatpush1.bf16.msra.mxu0 %v178
    %345 = vmatprep.subr.bf16.mxu0 0
    %346 = vmatpush2.bf16.msra.mxu0 0
    %347 = vmatprep.subr.bf16.mxu0 0
    %348 = vmatpush2.bf16.msra.mxu0 0
    %349 = vmatprep.subr.bf16.mxu0 0
    %350 = vmatpush2.bf16.msra.mxu0 0
    %351 = vmatprep.subr.bf16.mxu0 0
    %352 = vmatpush2.bf16.msra.mxu0 0
    %353 = vmatprep.subr.bf16.mxu0 0
    %354 = vmatpush2.bf16.msra.mxu0 0
    %355 = vmatprep.subr.bf16.mxu0 0
    %356 = vmatpush2.bf16.msra.mxu0 0
    %357 = vmatprep.subr.bf16.mxu0 0
    %358 = vmatpush2.bf16.msra.mxu0 0
    %359 = vmatprep.subr.bf16.mxu0 0
    %360 = vmatpush2.bf16.msra.mxu0 0
    %361 = vmatprep.mubr.bf16.mxu0 0
    %362 = vmatmul.mubr.bf16.gmra.mxu0 %v327
    %v363 = vpop.f32.mrf.mxu0
    %v364 = vadd.f32 0.0, %v363
    %v365 = vpop.f32.mrf.mxu0
    %v366 = vpop.f32.mrf.mxu0
    %v367 = vpop.f32.mrf.mxu0
    %368 = vdwg.mxu0
    %v369 = vadd.f32 %v144, %v364
    %v370 = vxor.u32 %v369, 2147483648
    %v371 = vmul.f32 %v370, 1.442695
    %v372 = vpow.pop %v371
    %v373 = vadd.f32 %v372, 1.0
    %v374 = vrcp.pop %v373
    %v375 = vmul.f32 1.0, %v374
    %v376 = vtanh.pop %v369
    %v377 = vmul.f32 %v375, %v315
    %379 = vrot.lane.b32.xlu0 %v376, 32
    %v380 = vpop.permute.xlu0 %379
    %v382 = vmul.f32 %v375, %v380
    %384 = vrot.lane.b32.xlu0 %v382, 32
    %v385 = vpop.permute.xlu0 %384
    %v387 = vadd.f32 %v377, %v385
    %v388 = vtanh.pop %v387
    %390 = vrot.lane.b32.xlu0 %v388, 32
    %v391 = vpop.permute.xlu0 %390
    %v393 = vmul.f32 %v375, %v391
    %v394 = vpack.c.bf16 %v393, %v393
    %396 = vrot.lane.b32.xlu0 %v394, 64
    %v397 = vpop.permute.xlu0 %396
    %v399 = vsel %vm88, %v397, 0
    %401 = vmatprep.subr.bf16.mxu0 0
    %402 = vmatpush1.bf16.msra.mxu0 0
    %403 = vmatprep.subr.bf16.mxu0 0
    %404 = vmatpush1.bf16.msra.mxu0 0
    %405 = vmatprep.subr.bf16.mxu0 0
    %406 = vmatpush1.bf16.msra.mxu0 0
    %407 = vmatprep.subr.bf16.mxu0 0
    %408 = vmatpush1.bf16.msra.mxu0 0
    %409 = vmatprep.subr.bf16.mxu0 0
    %410 = vmatpush1.bf16.msra.mxu0 0
    %411 = vmatprep.subr.bf16.mxu0 0
    %412 = vmatpush1.bf16.msra.mxu0 0
    %413 = vmatprep.subr.bf16.mxu0 0
    %414 = vmatpush1.bf16.msra.mxu0 %v179
    %415 = vmatprep.subr.bf16.mxu0 0
    %416 = vmatpush1.bf16.msra.mxu0 %v178
    %417 = vmatprep.subr.bf16.mxu0 0
    %418 = vmatpush2.bf16.msra.mxu0 0
    %419 = vmatprep.subr.bf16.mxu0 0
    %420 = vmatpush2.bf16.msra.mxu0 0
    %421 = vmatprep.subr.bf16.mxu0 0
    %422 = vmatpush2.bf16.msra.mxu0 0
    %423 = vmatprep.subr.bf16.mxu0 0
    %424 = vmatpush2.bf16.msra.mxu0 0
    %425 = vmatprep.subr.bf16.mxu0 0
    %426 = vmatpush2.bf16.msra.mxu0 0
    %427 = vmatprep.subr.bf16.mxu0 0
    %428 = vmatpush2.bf16.msra.mxu0 0
    %429 = vmatprep.subr.bf16.mxu0 0
    %430 = vmatpush2.bf16.msra.mxu0 0
    %431 = vmatprep.subr.bf16.mxu0 0
    %432 = vmatpush2.bf16.msra.mxu0 0
    %433 = vmatprep.mubr.bf16.mxu0 0
    %434 = vmatmul.mubr.bf16.gmra.mxu0 %v399
    %v435 = vpop.f32.mrf.mxu0
    %v436 = vadd.f32 0.0, %v435
    %v437 = vpop.f32.mrf.mxu0
    %v438 = vpop.f32.mrf.mxu0
    %v439 = vpop.f32.mrf.mxu0
    %440 = vdwg.mxu0
    %v441 = vadd.f32 %v147, %v436
    %v442 = vxor.u32 %v441, 2147483648
    %v443 = vmul.f32 %v442, 1.442695
    %v444 = vpow.pop %v443
    %v445 = vadd.f32 %v444, 1.0
    %v446 = vrcp.pop %v445
    %v447 = vmul.f32 1.0, %v446
    %v448 = vtanh.pop %v441
    %v449 = vmul.f32 %v447, %v387
    %451 = vrot.lane.b32.xlu0 %v448, 32
    %v452 = vpop.permute.xlu0 %451
    %v454 = vmul.f32 %v447, %v452
    %456 = vrot.lane.b32.xlu0 %v454, 32
    %v457 = vpop.permute.xlu0 %456
    %v459 = vadd.f32 %v449, %v457
    %v460 = vtanh.pop %v459
    %462 = vrot.lane.b32.xlu0 %v460, 32
    %v463 = vpop.permute.xlu0 %462
    %v465 = vmul.f32 %v447, %v463
    %v466 = vpack.c.bf16 %v465, %v465
    %468 = vrot.lane.b32.xlu0 %v466, 64
    %v469 = vpop.permute.xlu0 %468
    %v471 = vsel %vm88, %v469, 0
    %473 = vmatprep.subr.bf16.mxu0 0
    %474 = vmatpush1.bf16.msra.mxu0 0
    %475 = vmatprep.subr.bf16.mxu0 0
    %476 = vmatpush1.bf16.msra.mxu0 0
    %477 = vmatprep.subr.bf16.mxu0 0
    %478 = vmatpush1.bf16.msra.mxu0 0
    %479 = vmatprep.subr.bf16.mxu0 0
    %480 = vmatpush1.bf16.msra.mxu0 0
    %481 = vmatprep.subr.bf16.mxu0 0
    %482 = vmatpush1.bf16.msra.mxu0 0
    %483 = vmatprep.subr.bf16.mxu0 0
    %484 = vmatpush1.bf16.msra.mxu0 0
    %485 = vmatprep.subr.bf16.mxu0 0
    %486 = vmatpush1.bf16.msra.mxu0 %v179
    %487 = vmatprep.subr.bf16.mxu0 0
    %488 = vmatpush1.bf16.msra.mxu0 %v178
    %489 = vmatprep.subr.bf16.mxu0 0
    %490 = vmatpush2.bf16.msra.mxu0 0
    %491 = vmatprep.subr.bf16.mxu0 0
    %492 = vmatpush2.bf16.msra.mxu0 0
    %493 = vmatprep.subr.bf16.mxu0 0
    %494 = vmatpush2.bf16.msra.mxu0 0
    %495 = vmatprep.subr.bf16.mxu0 0
    %496 = vmatpush2.bf16.msra.mxu0 0
    %497 = vmatprep.subr.bf16.mxu0 0
    %498 = vmatpush2.bf16.msra.mxu0 0
    %499 = vmatprep.subr.bf16.mxu0 0
    %500 = vmatpush2.bf16.msra.mxu0 0
    %501 = vmatprep.subr.bf16.mxu0 0
    %502 = vmatpush2.bf16.msra.mxu0 0
    %503 = vmatprep.subr.bf16.mxu0 0
    %504 = vmatpush2.bf16.msra.mxu0 0
    %505 = vmatprep.mubr.bf16.mxu0 0
    %506 = vmatmul.mubr.bf16.gmra.mxu0 %v471
    %v507 = vpop.f32.mrf.mxu0
    %v508 = vadd.f32 0.0, %v507
    %v509 = vpop.f32.mrf.mxu0
    %v510 = vpop.f32.mrf.mxu0
    %v511 = vpop.f32.mrf.mxu0
    %512 = vdwg.mxu0
    %v513 = vadd.f32 %v152, %v508
    %v514 = vxor.u32 %v513, 2147483648
    %v515 = vmul.f32 %v514, 1.442695
    %v516 = vpow.pop %v515
    %v517 = vadd.f32 %v516, 1.0
    %v518 = vrcp.pop %v517
    %v519 = vmul.f32 1.0, %v518
    %v520 = vtanh.pop %v513
    %v521 = vmul.f32 %v519, %v459
    %523 = vrot.lane.b32.xlu0 %v520, 32
    %v524 = vpop.permute.xlu0 %523
    %v526 = vmul.f32 %v519, %v524
    %528 = vrot.lane.b32.xlu0 %v526, 32
    %v529 = vpop.permute.xlu0 %528
    %v531 = vadd.f32 %v521, %v529
    %v532 = vtanh.pop %v531
    %534 = vrot.lane.b32.xlu0 %v532, 32
    %v535 = vpop.permute.xlu0 %534
    %v537 = vmul.f32 %v519, %v535
    %v538 = vpack.c.bf16 %v537, %v537
    %540 = vrot.lane.b32.xlu0 %v538, 64
    %v541 = vpop.permute.xlu0 %540
    %v543 = vsel %vm88, %v541, 0
    %545 = vmatprep.subr.bf16.mxu0 0
    %546 = vmatpush1.bf16.msra.mxu0 0
    %547 = vmatprep.subr.bf16.mxu0 0
    %548 = vmatpush1.bf16.msra.mxu0 0
    %549 = vmatprep.subr.bf16.mxu0 0
    %550 = vmatpush1.bf16.msra.mxu0 0
    %551 = vmatprep.subr.bf16.mxu0 0
    %552 = vmatpush1.bf16.msra.mxu0 0
    %553 = vmatprep.subr.bf16.mxu0 0
    %554 = vmatpush1.bf16.msra.mxu0 0
    %555 = vmatprep.subr.bf16.mxu0 0
    %556 = vmatpush1.bf16.msra.mxu0 0
    %557 = vmatprep.subr.bf16.mxu0 0
    %558 = vmatpush1.bf16.msra.mxu0 %v179
    %559 = vmatprep.subr.bf16.mxu0 0
    %560 = vmatpush1.bf16.msra.mxu0 %v178
    %561 = vmatprep.subr.bf16.mxu0 0
    %562 = vmatpush2.bf16.msra.mxu0 0
    %563 = vmatprep.subr.bf16.mxu0 0
    %564 = vmatpush2.bf16.msra.mxu0 0
    %565 = vmatprep.subr.bf16.mxu0 0
    %566 = vmatpush2.bf16.msra.mxu0 0
    %567 = vmatprep.subr.bf16.mxu0 0
    %568 = vmatpush2.bf16.msra.mxu0 0
    %569 = vmatprep.subr.bf16.mxu0 0
    %570 = vmatpush2.bf16.msra.mxu0 0
    %571 = vmatprep.subr.bf16.mxu0 0
    %572 = vmatpush2.bf16.msra.mxu0 0
    %573 = vmatprep.subr.bf16.mxu0 0
    %574 = vmatpush2.bf16.msra.mxu0 0
    %575 = vmatprep.subr.bf16.mxu0 0
    %576 = vmatpush2.bf16.msra.mxu0 0
    %577 = vmatprep.mubr.bf16.mxu0 0
    %578 = vmatmul.mubr.bf16.gmra.mxu0 %v543
    %v579 = vpop.f32.mrf.mxu0
    %v580 = vadd.f32 0.0, %v579
    %v581 = vpop.f32.mrf.mxu0
    %v582 = vpop.f32.mrf.mxu0
    %v583 = vpop.f32.mrf.mxu0
    %584 = vdwg.mxu0
    %v585 = vadd.f32 %v155, %v580
    %v586 = vxor.u32 %v585, 2147483648
    %v587 = vmul.f32 %v586, 1.442695
    %v588 = vpow.pop %v587
    %v589 = vadd.f32 %v588, 1.0
    %v590 = vrcp.pop %v589
    %v591 = vmul.f32 1.0, %v590
    %v592 = vtanh.pop %v585
    %v593 = vmul.f32 %v591, %v531
    %595 = vrot.lane.b32.xlu0 %v592, 32
    %v596 = vpop.permute.xlu0 %595
    %v598 = vmul.f32 %v591, %v596
    %600 = vrot.lane.b32.xlu0 %v598, 32
    %v601 = vpop.permute.xlu0 %600
    %v603 = vadd.f32 %v593, %v601
    %v604 = vtanh.pop %v603
    %606 = vrot.lane.b32.xlu0 %v604, 32
    %v607 = vpop.permute.xlu0 %606
    %v609 = vmul.f32 %v591, %v607
    %v610 = vpack.c.bf16 %v609, %v609
    %612 = vrot.lane.b32.xlu0 %v610, 64
    %v613 = vpop.permute.xlu0 %612
    %v615 = vsel %vm88, %v613, 0
    %617 = vmatprep.subr.bf16.mxu0 0
    %618 = vmatpush1.bf16.msra.mxu0 0
    %619 = vmatprep.subr.bf16.mxu0 0
    %620 = vmatpush1.bf16.msra.mxu0 0
    %621 = vmatprep.subr.bf16.mxu0 0
    %622 = vmatpush1.bf16.msra.mxu0 0
    %623 = vmatprep.subr.bf16.mxu0 0
    %624 = vmatpush1.bf16.msra.mxu0 0
    %625 = vmatprep.subr.bf16.mxu0 0
    %626 = vmatpush1.bf16.msra.mxu0 0
    %627 = vmatprep.subr.bf16.mxu0 0
    %628 = vmatpush1.bf16.msra.mxu0 0
    %629 = vmatprep.subr.bf16.mxu0 0
    %630 = vmatpush1.bf16.msra.mxu0 %v179
    %631 = vmatprep.subr.bf16.mxu0 0
    %632 = vmatpush1.bf16.msra.mxu0 %v178
    %633 = vmatprep.subr.bf16.mxu0 0
    %634 = vmatpush2.bf16.msra.mxu0 0
    %635 = vmatprep.subr.bf16.mxu0 0
    %636 = vmatpush2.bf16.msra.mxu0 0
    %637 = vmatprep.subr.bf16.mxu0 0
    %638 = vmatpush2.bf16.msra.mxu0 0
    %639 = vmatprep.subr.bf16.mxu0 0
    %640 = vmatpush2.bf16.msra.mxu0 0
    %641 = vmatprep.subr.bf16.mxu0 0
    %642 = vmatpush2.bf16.msra.mxu0 0
    %643 = vmatprep.subr.bf16.mxu0 0
    %644 = vmatpush2.bf16.msra.mxu0 0
    %645 = vmatprep.subr.bf16.mxu0 0
    %646 = vmatpush2.bf16.msra.mxu0 0
    %647 = vmatprep.subr.bf16.mxu0 0
    %648 = vmatpush2.bf16.msra.mxu0 0
    %649 = vmatprep.mubr.bf16.mxu0 0
    %650 = vmatmul.mubr.bf16.gmra.mxu0 %v615
    %v651 = vpop.f32.mrf.mxu0
    %v652 = vadd.f32 0.0, %v651
    %v653 = vpop.f32.mrf.mxu0
    %v654 = vpop.f32.mrf.mxu0
    %v655 = vpop.f32.mrf.mxu0
    %656 = vdwg.mxu0
    %v657 = vadd.f32 %v160, %v652
    %v658 = vxor.u32 %v657, 2147483648
    %v659 = vmul.f32 %v658, 1.442695
    %v660 = vpow.pop %v659
    %v661 = vadd.f32 %v660, 1.0
    %v662 = vrcp.pop %v661
    %v663 = vmul.f32 1.0, %v662
    %v664 = vtanh.pop %v657
    %v665 = vmul.f32 %v663, %v603
    %667 = vrot.lane.b32.xlu0 %v664, 32
    %v668 = vpop.permute.xlu0 %667
    %v670 = vmul.f32 %v663, %v668
    %672 = vrot.lane.b32.xlu0 %v670, 32
    %v673 = vpop.permute.xlu0 %672
    %v675 = vadd.f32 %v665, %v673
    %v676 = vtanh.pop %v675
    %678 = vrot.lane.b32.xlu0 %v676, 32
    %v679 = vpop.permute.xlu0 %678
    %v681 = vmul.f32 %v663, %v679
    %v682 = vpack.c.bf16 %v681, %v681
    %684 = vrot.lane.b32.xlu0 %v682, 64
    %v685 = vpop.permute.xlu0 %684
    %v687 = vsel %vm88, %v685, 0
    %689 = vmatprep.subr.bf16.mxu0 0
    %690 = vmatpush1.bf16.msra.mxu0 0
    %691 = vmatprep.subr.bf16.mxu0 0
    %692 = vmatpush1.bf16.msra.mxu0 0
    %693 = vmatprep.subr.bf16.mxu0 0
    %694 = vmatpush1.bf16.msra.mxu0 0
    %695 = vmatprep.subr.bf16.mxu0 0
    %696 = vmatpush1.bf16.msra.mxu0 0
    %697 = vmatprep.subr.bf16.mxu0 0
    %698 = vmatpush1.bf16.msra.mxu0 0
    %699 = vmatprep.subr.bf16.mxu0 0
    %700 = vmatpush1.bf16.msra.mxu0 0
    %701 = vmatprep.subr.bf16.mxu0 0
    %702 = vmatpush1.bf16.msra.mxu0 %v179
    %703 = vmatprep.subr.bf16.mxu0 0
    %704 = vmatpush1.bf16.msra.mxu0 %v178
    %705 = vmatprep.subr.bf16.mxu0 0
    %706 = vmatpush2.bf16.msra.mxu0 0
    %707 = vmatprep.subr.bf16.mxu0 0
    %708 = vmatpush2.bf16.msra.mxu0 0
    %709 = vmatprep.subr.bf16.mxu0 0
    %710 = vmatpush2.bf16.msra.mxu0 0
    %711 = vmatprep.subr.bf16.mxu0 0
    %712 = vmatpush2.bf16.msra.mxu0 0
    %713 = vmatprep.subr.bf16.mxu0 0
    %714 = vmatpush2.bf16.msra.mxu0 0
    %715 = vmatprep.subr.bf16.mxu0 0
    %716 = vmatpush2.bf16.msra.mxu0 0
    %717 = vmatprep.subr.bf16.mxu0 0
    %718 = vmatpush2.bf16.msra.mxu0 0
    %719 = vmatprep.subr.bf16.mxu0 0
    %720 = vmatpush2.bf16.msra.mxu0 0
    %721 = vmatprep.mubr.bf16.mxu0 0
    %722 = vmatmul.mubr.bf16.gmra.mxu0 %v687
    %v723 = vpop.f32.mrf.mxu0
    %v724 = vadd.f32 0.0, %v723
    %v725 = vpop.f32.mrf.mxu0
    %v726 = vpop.f32.mrf.mxu0
    %v727 = vpop.f32.mrf.mxu0
    %728 = vdwg.mxu0
    %v729 = vadd.f32 %v163, %v724
    %v730 = vxor.u32 %v729, 2147483648
    %v731 = vmul.f32 %v730, 1.442695
    %v732 = vpow.pop %v731
    %v733 = vadd.f32 %v732, 1.0
    %v734 = vrcp.pop %v733
    %v735 = vmul.f32 1.0, %v734
    %v736 = vtanh.pop %v729
    %v737 = vmul.f32 %v735, %v675
    %739 = vrot.lane.b32.xlu0 %v736, 32
    %v740 = vpop.permute.xlu0 %739
    %v742 = vmul.f32 %v735, %v740
    %744 = vrot.lane.b32.xlu0 %v742, 32
    %v745 = vpop.permute.xlu0 %744
    %v747 = vadd.f32 %v737, %v745
    %v748 = vtanh.pop %v747
    %750 = vrot.lane.b32.xlu0 %v748, 32
    %v751 = vpop.permute.xlu0 %750
    %v753 = vmul.f32 %v735, %v751
    %v754 = vpack.c.bf16 %v753, %v753
    %v755 = vld [vmem:[%s4] sm:$0xf]
    %v756 = vld [vmem:[%s4 + $0x4] sm:$0xf]
    %v757 = vld [vmem:[%s4 + $0x8] sm:$0xf]
    %v758 = vld [vmem:[%s4 + $0xc] sm:$0xf]
    %v759 = vld [vmem:[%s5] sm:$0x1]
    %v761 = vlaneseq
    %v762 = vshrl.u32 %v761, 7
    %v763 = vsub.s32 0, %v762
    %v764 = vrot.slane %v759, %v763
    %767 = vrot.lane.b32.xlu0 %v754, 64
    %v768 = vpop.permute.xlu0 %767
    %v773 = vunpack.c.l.b16 %v755
    %v774 = vunpack.c.l.b16 %v756
    %v775 = vunpack.c.l.b16 %v757
    %v776 = vunpack.c.l.b16 %v758
    %v777 = vpack.c.b16 %v774, %v773
    %v778 = vpack.c.b16 %v776, %v775
    %v782 = vsel %vm88, %v768, 0
    %784 = vmatprep.subr.bf16.mxu0 0
    %785 = vmatpush1.bf16.msra.mxu0 0
    %786 = vmatprep.subr.bf16.mxu0 0
    %787 = vmatpush1.bf16.msra.mxu0 0
    %788 = vmatprep.subr.bf16.mxu0 0
    %789 = vmatpush1.bf16.msra.mxu0 0
    %790 = vmatprep.subr.bf16.mxu0 0
    %791 = vmatpush1.bf16.msra.mxu0 0
    %792 = vmatprep.subr.bf16.mxu0 0
    %793 = vmatpush1.bf16.msra.mxu0 0
    %794 = vmatprep.subr.bf16.mxu0 0
    %795 = vmatpush1.bf16.msra.mxu0 0
    %796 = vmatprep.subr.bf16.mxu0 0
    %797 = vmatpush1.bf16.msra.mxu0 %v778
    %798 = vmatprep.subr.bf16.mxu0 0
    %799 = vmatpush1.bf16.msra.mxu0 %v777
    %800 = vmatprep.subr.bf16.mxu0 0
    %801 = vmatpush2.bf16.msra.mxu0 0
    %802 = vmatprep.subr.bf16.mxu0 0
    %803 = vmatpush2.bf16.msra.mxu0 0
    %804 = vmatprep.subr.bf16.mxu0 0
    %805 = vmatpush2.bf16.msra.mxu0 0
    %806 = vmatprep.subr.bf16.mxu0 0
    %807 = vmatpush2.bf16.msra.mxu0 0
    %808 = vmatprep.subr.bf16.mxu0 0
    %809 = vmatpush2.bf16.msra.mxu0 0
    %810 = vmatprep.subr.bf16.mxu0 0
    %811 = vmatpush2.bf16.msra.mxu0 0
    %812 = vmatprep.subr.bf16.mxu0 0
    %813 = vmatpush2.bf16.msra.mxu0 0
    %814 = vmatprep.subr.bf16.mxu0 0
    %815 = vmatpush2.bf16.msra.mxu0 0
    %816 = vmatprep.mubr.bf16.mxu0 0
    %817 = vmatmul.mubr.bf16.gmra.mxu0 %v782
    %v818 = vpop.f32.mrf.mxu0
    %v819 = vadd.f32 %v764, %v818
    %v820 = vpop.f32.mrf.mxu0
    %v821 = vpop.f32.mrf.mxu0
    %v822 = vpop.f32.mrf.mxu0
    %823 = vdwg.mxu0
    %vm824 = vcmask 130048
    %825 = vst.msk [vmem:[#allocation7] sm:$0xff] %vm824, %v819
    // Predicated region
    $region34: #{audio2kp_forward.1} parent=1 // pred_check
      _
    $region35: #{audio2kp_forward.1} parent=1 // pred_check_branch
      %827 = sbr.rel (0) target = $region37
    $region36: #{audio2kp_forward.1} parent=1 // pred_region
      %s829 = ssub.s32 128, 128
      %830 = vsyncadd [#allocation4], %s829
      %s832 = sshll.u32 [#allocation7], 4
      %s833 = int_to_ptr.vmem [resolvable:$true] %s832
      %835 = dma.vmem_to_hbm [thread:$0]  %s833, 128, %s6, [#allocation4]
    $region37: #{audio2kp_forward.1} parent=1 // pred_fallthru
      _
    // Predicated region
    $region38: #{audio2kp_forward.1} parent=1 // pred_check
      _
    $region39: #{audio2kp_forward.1} parent=1 // pred_check_branch
      %837 = sbr.rel (0) target = $region41
    $region40: #{audio2kp_forward.1} parent=1 // pred_region
      %838 = dma.done [#allocation4], 128
    $region41: #{audio2kp_forward.1} parent=1 // pred_fallthru
      _
    %839 = vsyncpa [#allocation3], 1
    %840 = vsyncpa [#allocation6], 1
    %841 = vsyncpa [#allocation4], 1

</llo_original>
